<compile_context>
chip_gen: v5e
topology: v5e:2x2
jax: 0.10.0
libtpu: 0.0.40
codegen_flags: <defaults>
</compile_context>

<pallas_src>
import functools

import jax
import jax.numpy as jnp
from jax.experimental import pallas as pl
from jax.experimental.pallas import tpu as pltpu


def _ada_ln_kernel(params_ref, x_ref, o_ref, *, eps, inv_d):
    """params_ref: (2, D) f32 [row0 = 1+scale, row1 = shift];
    x_ref / o_ref: (tile, D) native dtype."""
    x = x_ref[...].astype(jnp.float32)                  # (tile, D)
    # Fused one-pass statistics, kept in f32.
    s1 = jnp.sum(x, axis=-1, keepdims=True)             # (tile, 1)
    s2 = jnp.sum(x * x, axis=-1, keepdims=True)         # (tile, 1)
    mean = s1 * inv_d
    var = jnp.maximum(s2 * inv_d - mean * mean, 0.0)
    r = jax.lax.rsqrt(var + eps)                        # EUP slot
    scale1 = params_ref[0:1, :]                         # (1, D) = 1 + scale
    shift = params_ref[1:2, :]                          # (1, D)
    o_ref[...] = ((x - mean) * r * scale1 + shift).astype(o_ref.dtype)


def _pick_tile_and_vmem(rows, D, itemsize):
    """Row tile + explicit scoped-VMEM limit.

    Per-row VMEM bytes: double-buffered in + out tiles in the native dtype
    (2 arrays x 2 buffers) plus ~4 (tile, D) f32 in-kernel temporaries.
    """
    bytes_per_row = D * (4 * itemsize + 4 * 4)
    try:
        phys = int(getattr(pltpu.get_tpu_info(), "vmem_capacity_bytes", 64 << 20))
    except Exception:  # hardware query unavailable (e.g. interpret mode)
        phys = 64 << 20
    # Chip-aware budget: half of physical VMEM, never more than 64 MiB
    # (v5e/v6e: 128 MiB physical -> 64 MiB; v7x: 64 MiB physical -> 32 MiB).
    budget = min(phys // 2, 64 << 20)

    align = 16 if itemsize < 4 else 8        # sublane packing for narrow dtypes
    tile = min(1024, max(align, budget // bytes_per_row))
    tile = max(align, (tile // align) * align)
    rows_aligned = max(align, ((rows + align - 1) // align) * align)
    tile = min(tile, rows_aligned)
    # Guarantee >= 2 grid steps when possible so both v7x TensorCores get work.
    if rows > align and pl.cdiv(rows, tile) < 2:
        half = pl.cdiv(rows, 2)
        tile = max(align, ((half + align - 1) // align) * align)

    vmem_limit = max(32 << 20, tile * bytes_per_row + (1 << 20))
    return tile, int(vmem_limit)


def ada_layer_norm(x, timestep, emb_table, lin_w, lin_b, *, eps=1e-5, tile=None):
    """x: (B, S, D); timestep: scalar int index;
    emb_table: (num_embeddings, D); lin_w: (2D, D); lin_b: (2D,)."""
    B, S, D = x.shape
    rows = B * S

    # ---- adaptive parameters: tiny, computed ONCE outside the hot loop ------
    e = emb_table[timestep].astype(jnp.float32)                       # (D,)
    h = e * jax.nn.sigmoid(e)                                         # SiLU
    # Contract over D directly (avoids a materialized (2D, D) transpose copy).
    proj = jnp.dot(lin_w.astype(jnp.float32), h) + lin_b.astype(jnp.float32)  # (2D,)
    params = jnp.stack([1.0 + proj[:D], proj[D:]], axis=0)            # (2, D) f32

    # ---- tiling (no padding: ragged tail handled by grid-edge masking) ------
    itemsize = jnp.dtype(x.dtype).itemsize
    if tile is None:
        tile, vmem_limit = _pick_tile_and_vmem(rows, D, itemsize)
    else:
        vmem_limit = max(32 << 20, tile * D * (4 * itemsize + 16) + (1 << 20))
    n_tiles = pl.cdiv(rows, tile)

    x_flat = x.reshape(rows, D)
    kernel = functools.partial(_ada_ln_kernel, eps=eps, inv_d=1.0 / D)

    out = pl.pallas_call(
        kernel,
        out_shape=jax.ShapeDtypeStruct((rows, D), x.dtype),
        grid=(n_tiles,),
        in_specs=[
            pl.BlockSpec((2, D), lambda i: (0, 0)),                   # resident params
            pl.BlockSpec((tile, D), lambda i: (i, 0)),                # x rows
        ],
        out_specs=pl.BlockSpec((tile, D), lambda i: (i, 0)),
        compiler_params=pltpu.CompilerParams(
            dimension_semantics=("parallel",),                        # no cross-step carry
            vmem_limit_bytes=int(vmem_limit),
        ),
    )(params, x_flat)

    return out.reshape(B, S, D)


def _reference(x, timestep, emb_table, lin_w, lin_b, eps=1e-5):
    e = emb_table[timestep].astype(jnp.float32)                       # (D,)
    h = e * jax.nn.sigmoid(e)
    proj = h @ lin_w.astype(jnp.float32).T + lin_b.astype(jnp.float32)  # (2D,)
    D = x.shape[-1]
    scale, shift = proj[:D], proj[D:]
    xf = x.astype(jnp.float32)
    mean = jnp.mean(xf, axis=-1, keepdims=True)
    var = jnp.mean((xf - mean) ** 2, axis=-1, keepdims=True)
    xn = (xf - mean) / jnp.sqrt(var + eps)
    return (xn * (1 + scale) + shift).astype(x.dtype)


if __name__ == "__main__":
    num_embeddings = 16
    timestep = 3              # scalar timestep index, as in diffusers AdaLayerNorm

    key = jax.random.PRNGKey(0)
    k1, k2, k3, k4 = jax.random.split(key, 4)

    B, S, D = 2, 8, 32        # batch, seq, embedding_dim
    x = jax.random.normal(k1, (B, S, D), dtype=jnp.float32)
    emb_table = jax.random.normal(k2, (num_embeddings, D), dtype=jnp.float32)
    lin_w = jax.random.normal(k3, (2 * D, D), dtype=jnp.float32) * 0.02
    lin_b = jax.random.normal(k4, (2 * D,), dtype=jnp.float32) * 0.02

    out = jax.block_until_ready(ada_layer_norm(x, timestep, emb_table, lin_w, lin_b))
    ref = _reference(x, timestep, emb_table, lin_w, lin_b)
    assert out.shape == (B, S, D)
    assert jnp.allclose(out, ref, atol=1e-5, rtol=1e-5), "mismatch vs reference"

    # Ragged-tail path (rows not a multiple of the tile): no pad/slice round trips.
    S2 = 9
    x2 = jax.random.normal(k1, (B, S2, D), dtype=jnp.float32)
    out2 = jax.block_until_ready(ada_layer_norm(x2, timestep, emb_table, lin_w, lin_b))
    ref2 = _reference(x2, timestep, emb_table, lin_w, lin_b)
    assert out2.shape == (B, S2, D)
    assert jnp.allclose(out2, ref2, atol=1e-5, rtol=1e-5), "ragged-tail mismatch"

    print("KERNEL_OK")
</pallas_src>

<mosaic_0001>
module attributes {stable_mosaic.version = 11 : i64} {
  func.func @_ada_ln_kernel(%arg0: i32, %arg1: memref<2x32xf32, #tpu.memory_space<vmem>>, %arg2: memref<8x32xf32, #tpu.memory_space<vmem>>, %arg3: memref<8x32xf32, #tpu.memory_space<vmem>>) attributes {dimension_semantics = [#tpu.dimension_semantics<parallel>], iteration_bounds = array<i64: 2>, scalar_prefetch = 0 : i64, scratch_operands = 0 : i64, tpu.core_type = #tpu.core_type<tc>, window_params = [{pipeline_mode = #tpu.pipeline_mode<synchronous>, transform_indices = @transform_0, window_bounds = array<i64: 2, 32>}, {transform_indices = @transform_1, window_bounds = array<i64: 8, 32>}, {transform_indices = @transform_2, window_bounds = array<i64: 8, 32>}]} {
    %c0 = arith.constant 0 : index
    %c0_0 = arith.constant 0 : index
    %0 = vector.load %arg2[%c0, %c0_0] : memref<8x32xf32, #tpu.memory_space<vmem>>, vector<8x32xf32>
    %cst = arith.constant dense<0.000000e+00> : vector<8xf32>
    %1 = vector.multi_reduction <add>, %0, %cst [1] : vector<8x32xf32> to vector<8xf32>
    %2 = vector.shape_cast %1 : vector<8xf32> to vector<8x1xf32>
    %3 = arith.mulf %0, %0 : vector<8x32xf32>
    %cst_1 = arith.constant dense<0.000000e+00> : vector<8xf32>
    %4 = vector.multi_reduction <add>, %3, %cst_1 [1] : vector<8x32xf32> to vector<8xf32>
    %5 = vector.shape_cast %4 : vector<8xf32> to vector<8x1xf32>
    %cst_2 = arith.constant 3.125000e-02 : f32
    %6 = vector.broadcast %cst_2 : f32 to vector<8x1xf32>
    %7 = arith.mulf %2, %6 : vector<8x1xf32>
    %cst_3 = arith.constant 3.125000e-02 : f32
    %8 = vector.broadcast %cst_3 : f32 to vector<8x1xf32>
    %9 = arith.mulf %5, %8 : vector<8x1xf32>
    %10 = arith.mulf %7, %7 : vector<8x1xf32>
    %11 = arith.subf %9, %10 : vector<8x1xf32>
    %cst_4 = arith.constant 0.000000e+00 : f32
    %12 = vector.broadcast %cst_4 : f32 to vector<8x1xf32>
    %13 = arith.maximumf %11, %12 : vector<8x1xf32>
    %cst_5 = arith.constant 9.99999974E-6 : f32
    %14 = vector.broadcast %cst_5 : f32 to vector<8x1xf32>
    %15 = arith.addf %13, %14 : vector<8x1xf32>
    %16 = math.rsqrt %15 : vector<8x1xf32>
    %c0_6 = arith.constant 0 : index
    %c0_7 = arith.constant 0 : index
    %17 = vector.load %arg1[%c0_6, %c0_7] : memref<2x32xf32, #tpu.memory_space<vmem>>, vector<1x32xf32>
    %c1 = arith.constant 1 : index
    %c0_8 = arith.constant 0 : index
    %18 = vector.load %arg1[%c1, %c0_8] : memref<2x32xf32, #tpu.memory_space<vmem>>, vector<1x32xf32>
    %19 = vector.broadcast %7 : vector<8x1xf32> to vector<8x32xf32>
    %20 = arith.subf %0, %19 : vector<8x32xf32>
    %21 = vector.broadcast %16 : vector<8x1xf32> to vector<8x32xf32>
    %22 = arith.mulf %20, %21 : vector<8x32xf32>
    %23 = vector.broadcast %17 : vector<1x32xf32> to vector<8x32xf32>
    %24 = arith.mulf %22, %23 : vector<8x32xf32>
    %25 = vector.broadcast %18 : vector<1x32xf32> to vector<8x32xf32>
    %26 = arith.addf %24, %25 : vector<8x32xf32>
    %c0_9 = arith.constant 0 : index
    %c0_10 = arith.constant 0 : index
    %27 = vector.load %arg3[%c0_9, %c0_10] : memref<8x32xf32, #tpu.memory_space<vmem>>, vector<8x32xf32>
    tpu.vector_store %arg3[%c0_9, %c0_10], %26 {strides = array<i32>} : memref<8x32xf32, #tpu.memory_space<vmem>>, vector<8x32xf32>,
    return
  }
  func.func @transform_0(%arg0: i32) -> (i32, i32) {
    %c0_i32 = arith.constant 0 : i32
    %c0_i32_0 = arith.constant 0 : i32
    %c0_i32_1 = arith.constant 0 : i32
    return %c0_i32, %c0_i32_0 : i32, i32
  }
  func.func @transform_1(%arg0: i32) -> (i32, i32) {
    %c0_i32 = arith.constant 0 : i32
    %c0_i32_0 = arith.constant 0 : i32
    return %arg0, %c0_i32 : i32, i32
  }
  func.func @transform_2(%arg0: i32) -> (i32, i32) {
    %c0_i32 = arith.constant 0 : i32
    %c0_i32_0 = arith.constant 0 : i32
    return %arg0, %c0_i32 : i32, i32
  }
}

</mosaic_0001>

<llo_original>
// kernel: tpu_custom_call.1
$region0: #{tpu_custom_call.1}
  #allocation0 [shape = 'u32[]', space=smem, size = 0x4, offset = 0x4, fixed_abs, tag = 'smem constant byte address 0x4 - core index']
  #allocation1 [shape = 'u32[72,128]{1,0:T(1,128)}', space=vmem, size = 0x9000, scoped, tag = 'internal scratch']
  %s0 = inlined_call_operand.hbm [shape: f32[2,32], index: 0, kind: input, shape index: {}]
  %s1 = inlined_call_operand.hbm [shape: f32[16,32], index: 1, kind: input, shape index: {}]
  %s2 = inlined_call_operand.hbm [shape: f32[16,32], index: 2, kind: output, shape index: {}]
  %s3 = sld [smem:[#allocation0]]
  $region49: #{tpu_custom_call.1} parent=0
    _
  %s5 = ssub.s32 1, %s3
  %s6 = scalar_select 0, %s5, %s3
  $region1: #{tpu_custom_call.1} parent=0
    #allocation2 [shape = 'u8[1024]{0}', space=vmem, size = 0x400, scoped, tag = 'input window, operand 0, single buffered']
    #allocation3 [shape = 's32[2]{0}', space=sflag, size = 0x8, scoped, tag = 'scoped memory for tpu_custom_call.1']
    #allocation4 [shape = 's32[2]{0}', space=sflag, size = 0x8, scoped, tag = 'scoped memory for tpu_custom_call.1']
    #allocation5 [shape = 'u8[8192]{0}', space=vmem, size = 0x2000, scoped, tag = 'input window, operand 1']
    #allocation6 [shape = 's32[2]{0}', space=sflag, size = 0x8, scoped, tag = 'scoped memory for tpu_custom_call.1']
    #allocation7 [shape = 'u8[8192]{0}', space=vmem, size = 0x2000, scoped, tag = 'output window, operand 0']
    %7 = vsyncpa [#allocation3], 0
    %8 = vsyncpa [#allocation6], 0
    %s9 = scalar_lea.sflag [#allocation6], 1
    %10 = vsyncpa %s9, 0
    %11 = vsyncpa [#allocation4], 0
    %s12 = scalar_lea.sflag [#allocation4], 1
    %13 = vsyncpa %s12, 0
    loop: start=0, step=1, limit=4
    $region2: #{tpu_custom_call.1} parent=1 // loop_pre_header
      _
    $region3: #{tpu_custom_call.1} parent=1 // loop_header
      %s15 = sphi 0, %s19
      %p16 = scmp.ge.s32.totalorder %s15, 4
      %s23 = sphi 0, %s23
      %s25 = sphi 0, %s23
      %s26 = sphi 0, %s25
      %s40 = sphi 0, %s26
      %s46 = sphi 0, %s48
      %s49 = sphi 0, %s46
      %s50 = sphi 0, %s49
      %s66 = sphi 0, %s50
      %s72 = sphi 0, %s74
      %s75 = sphi 0, %s72
      %s76 = sphi 0, %s75
      %s92 = sphi 0, %s76
    $region4: #{tpu_custom_call.1} parent=1 // loop_header_branch
      %18 = sbr.rel (%p16) target = $region8
    $region5: #{tpu_custom_call.1} parent=1 // loop_body
      %s20 = ssub.s32 %s15, 1
      %s21 = ssub.s32 %s15, 2
      %s22 = sadd.s32 %s15, 1
      %s24 = sadd.s32 %s23, 1
      %p27 = scmp.eq.s32.totalorder %s15, 1
      %p28 = scmp.ne.s32.totalorder %s23, %s25
      %p29 = scmp.eq.s32.totalorder %s15, 0
      %p30 = por %p28, %p29
      %p31 = scmp.ne.s32.totalorder %s23, %s25
      %p32 = scmp.eq.s32.totalorder %s20, 1
      %p33 = por %p31, %p32
      %p34 = scmp.ne.s32.totalorder %s25, %s26
      %p35 = scmp.eq.s32.totalorder %s20, 0
      %p36 = por %p34, %p35
      %p37 = scmp.ne.s32.totalorder %s25, %s26
      %p38 = scmp.eq.s32.totalorder %s21, 1
      %p39 = por %p37, %p38
      %p41 = scmp.ne.s32.totalorder %s26, %s40
      %p42 = scmp.eq.s32.totalorder %s21, 0
      %p43 = por %p41, %p42
      %s44 = ssub.s32 %s15, %s22
      %p45 = scmp.eq.s32.totalorder %s44, 0
      %s47 = sadd.s32 %s46, 1
      %s48 = scalar_select %p45, %s46, %s47
      %p51 = pneg %p45
      %p52 = scmp.eq.s32.totalorder %s15, 1
      %p53 = por %p51, %p52
      %p54 = scmp.ne.s32.totalorder %s46, %s49
      %p55 = scmp.eq.s32.totalorder %s15, 0
      %p56 = por %p54, %p55
      %p57 = scmp.ne.s32.totalorder %s46, %s49
      %p58 = scmp.eq.s32.totalorder %s20, 1
      %p59 = por %p57, %p58
      %p60 = scmp.ne.s32.totalorder %s49, %s50
      %p61 = scmp.eq.s32.totalorder %s20, 0
      %p62 = por %p60, %p61
      %p63 = scmp.ne.s32.totalorder %s49, %s50
      %p64 = scmp.eq.s32.totalorder %s21, 1
      %p65 = por %p63, %p64
      %p67 = scmp.ne.s32.totalorder %s50, %s66
      %p68 = scmp.eq.s32.totalorder %s21, 0
      %p69 = por %p67, %p68
      %s70 = ssub.s32 %s15, %s22
      %p71 = scmp.eq.s32.totalorder %s70, 0
      %s73 = sadd.s32 %s72, 1
      %s74 = scalar_select %p71, %s72, %s73
      %p77 = pneg %p71
      %p78 = scmp.eq.s32.totalorder %s15, 1
      %p79 = por %p77, %p78
      %p80 = scmp.ne.s32.totalorder %s72, %s75
      %p81 = scmp.eq.s32.totalorder %s15, 0
      %p82 = por %p80, %p81
      %p83 = scmp.ne.s32.totalorder %s72, %s75
      %p84 = scmp.eq.s32.totalorder %s20, 1
      %p85 = por %p83, %p84
      %p86 = scmp.ne.s32.totalorder %s75, %s76
      %p87 = scmp.eq.s32.totalorder %s20, 0
      %p88 = por %p86, %p87
      %p89 = scmp.ne.s32.totalorder %s75, %s76
      %p90 = scmp.eq.s32.totalorder %s21, 1
      %p91 = por %p89, %p90
      %p93 = scmp.ne.s32.totalorder %s76, %s92
      %p94 = scmp.eq.s32.totalorder %s21, 0
      %p95 = por %p93, %p94
      %p96 = scmp.le.s32.totalorder 1, %s15
      %p97 = scmp.lt.s32.totalorder %s15, 3
      %p98 = pnand %p96, %p97
      %p99 = pneg %p98
      // Predicated region
      $region9: #{tpu_custom_call.1} parent=5 // pred_check
        _
      $region10: #{tpu_custom_call.1} parent=5 // pred_check_branch
        %101 = sbr.rel (%p98) target = $region12
      $region11: #{tpu_custom_call.1} parent=5 // pred_region
        %s102 = ssub.s32 %s15, 1
        // Predicated region
        $region13: #{tpu_custom_call.1} parent=11 // pred_check
          %p103 = pneg %p36
        $region14: #{tpu_custom_call.1} parent=11 // pred_check_branch
          %105 = sbr.rel (%p103) target = $region16
        $region15: #{tpu_custom_call.1} parent=11 // pred_region
          %107 = vsyncadd [#allocation3], 0
          %s109 = sshll.u32 %s0, 4
          %s110 = int_to_ptr.hbm [resolvable:$true] %s109
          %s111 = sshll.u32 [#allocation2], 4
          %s112 = int_to_ptr.vmem [resolvable:$true] %s111
          %114 = dma.hbm_to_vmem [thread:$0]  %s110, 32, %s112, [#allocation3]
        $region16: #{tpu_custom_call.1} parent=11 // pred_fallthru
          _
      $region12: #{tpu_custom_call.1} parent=5 // pred_fallthru
        _
      %p115 = scmp.lt.s32.totalorder %s15, 2
      // Predicated region
      $region17: #{tpu_custom_call.1} parent=5 // pred_check
        %p116 = pneg %p115
      $region18: #{tpu_custom_call.1} parent=5 // pred_check_branch
        %118 = sbr.rel (%p116) target = $region20
      $region19: #{tpu_custom_call.1} parent=5 // pred_region
        // Predicated region
        $region21: #{tpu_custom_call.1} parent=19 // pred_check
          %p119 = pneg %p56
        $region22: #{tpu_custom_call.1} parent=19 // pred_check_branch
          %121 = sbr.rel (%p119) target = $region24
        $region23: #{tpu_custom_call.1} parent=19 // pred_region
          %s122 = sand.u32 %s46, 1
          %s123 = scalar_lea.sflag [#allocation6], %s122
          %s124 = sand.u32 %s46, 1
          %s125 = smul.addr %s124, 8
          %s126 = scalar_lea.vmem [#allocation5], %s125
          %128 = vsyncadd %s123, 0
          %s129 = smul.addr %s15, 8
          %s130 = scalar_lea.hbm %s1, %s129
          %s132 = sshll.u32 %s130, 4
          %s133 = int_to_ptr.hbm [resolvable:$true] %s132
          %s134 = sshll.u32 %s126, 4
          %s135 = int_to_ptr.vmem [resolvable:$true] %s134
          %137 = dma.hbm_to_vmem [thread:$0]  %s133, 128, %s135, %s123
        $region24: #{tpu_custom_call.1} parent=19 // pred_fallthru
          _
      $region20: #{tpu_custom_call.1} parent=5 // pred_fallthru
        _
      %p138 = scmp.le.s32.totalorder 1, %s15
      %p139 = scmp.lt.s32.totalorder %s15, 3
      %p140 = pnand %p138, %p139
      %p141 = pneg %p140
      // Predicated region
      $region25: #{tpu_custom_call.1} parent=5 // pred_check
        _
      $region26: #{tpu_custom_call.1} parent=5 // pred_check_branch
        %143 = sbr.rel (%p140) target = $region28
      $region27: #{tpu_custom_call.1} parent=5 // pred_region
        %s144 = ssub.s32 %s15, 1
        // Predicated region
        $region29: #{tpu_custom_call.1} parent=27 // pred_check
          %p145 = pneg %p36
        $region30: #{tpu_custom_call.1} parent=27 // pred_check_branch
          %147 = sbr.rel (%p145) target = $region32
        $region31: #{tpu_custom_call.1} parent=27 // pred_region
          %149 = dma.done [#allocation3], 32
        $region32: #{tpu_custom_call.1} parent=27 // pred_fallthru
          _
        %s150 = sand.u32 %s49, 1
        %s151 = scalar_lea.sflag [#allocation6], %s150
        %s152 = sand.u32 %s49, 1
        %s153 = smul.addr %s152, 8
        %s154 = scalar_lea.vmem [#allocation5], %s153
        // Predicated region
        $region33: #{tpu_custom_call.1} parent=27 // pred_check
          %p155 = pneg %p62
        $region34: #{tpu_custom_call.1} parent=27 // pred_check_branch
          %157 = sbr.rel (%p155) target = $region36
        $region35: #{tpu_custom_call.1} parent=27 // pred_region
          %159 = dma.done %s151, 128
        $region36: #{tpu_custom_call.1} parent=27 // pred_fallthru
          _
        %p160 = pneg %p36
        %p161 = pneg %p33
        %s162 = sand.u32 %s49, 1
        %s163 = scalar_lea.sflag [#allocation6], %s162
        %s164 = sand.u32 %s49, 1
        %s165 = smul.addr %s164, 8
        %s166 = scalar_lea.vmem [#allocation5], %s165
        %p167 = pneg %p62
        %p168 = pneg %p59
        %p169 = pneg %p88
        %p170 = pneg %p85
        %s171 = sand.u32 %s75, 1
        %s172 = scalar_lea.sflag [#allocation4], %s171
        %s173 = sand.u32 %s75, 1
        %s174 = smul.addr %s173, 8
        %s175 = scalar_lea.vmem [#allocation7], %s174
        %v176 = vld [vmem:[%s154] sm:$0xff]
        %vm177 = vcmask 261120
        %v178 = vsel %vm177, %v176, 0.0
        %179 = vadd.xlane.f32.xlu0 %v178
        %v180 = vpop.xlane.xlu0 %179
        %v181 = vmul.f32 %v176, %v176
        %v182 = vsel %vm177, %v181, 0.0
        %183 = vadd.xlane.f32.xlu0 %v182
        %v184 = vpop.xlane.xlu0 %183
        %v185 = vmul.f32 %v180, 0.03125
        %v186 = vmul.f32 %v184, 0.03125
        %v187 = vmul.f32 %v185, %v185
        %v188 = vsub.f32 %v186, %v187
        %v189 = vmax.f32 %v188, 0.0
        %v190 = vadd.f32 %v189, 1e-05
        %v191 = vrsqrt.pop %v190
        %v192 = vmul.f32 %v191, %v190
        %v193 = vmul.f32 %v192, %v191
        %v194 = vmul.f32 0.5, %v193
        %v195 = vsub.f32 1.5, %v194
        %v196 = vmul.f32 %v191, %v195
        %vm197 = vweird.f32 %v190
        %vm198 = vweird.f32 %v191
        %vm199 = vmor %vm197, %vm198
        %v200 = vsel %vm199, %v191, %v196
        %v201 = vld [vmem:[#allocation2] sm:$0x1]
        %v202 = vld [vmem:[#allocation2 + $0x1] sm:$0x1]
        %v203 = vsub.f32 %v176, %v185
        %v204 = vmul.f32 %v203, %v200
        %v205 = vperm.slane %v201, 0
        %v206 = vmul.f32 %v204, %v205
        %v207 = vperm.slane %v202, 0
        %v208 = vadd.f32 %v206, %v207
        %209 = vst.msk [vmem:[%s175] sm:$0xff] %vm177, %v208
        %s210 = sand.u32 %s75, 1
        %s211 = scalar_lea.sflag [#allocation4], %s210
        %s212 = sand.u32 %s75, 1
        %s213 = smul.addr %s212, 8
        %s214 = scalar_lea.vmem [#allocation7], %s213
        // Predicated region
        $region37: #{tpu_custom_call.1} parent=27 // pred_check
          %p215 = pneg %p85
        $region38: #{tpu_custom_call.1} parent=27 // pred_check_branch
          %217 = sbr.rel (%p215) target = $region40
        $region39: #{tpu_custom_call.1} parent=27 // pred_region
          %219 = vsyncadd %s211, 0
          %s220 = smul.addr %s20, 8
          %s221 = scalar_lea.hbm %s2, %s220
          %s223 = sshll.u32 %s214, 4
          %s224 = int_to_ptr.vmem [resolvable:$true] %s223
          %s225 = sshll.u32 %s221, 4
          %s226 = int_to_ptr.hbm [resolvable:$true] %s225
          %228 = dma.vmem_to_hbm [thread:$0]  %s224, 128, %s226, %s211
        $region40: #{tpu_custom_call.1} parent=27 // pred_fallthru
          _
      $region28: #{tpu_custom_call.1} parent=5 // pred_fallthru
        _
      %p229 = scmp.le.s32.totalorder 2, %s15
      // Predicated region
      $region41: #{tpu_custom_call.1} parent=5 // pred_check
        %p230 = pneg %p229
      $region42: #{tpu_custom_call.1} parent=5 // pred_check_branch
        %232 = sbr.rel (%p230) target = $region44
      $region43: #{tpu_custom_call.1} parent=5 // pred_region
        %s233 = ssub.s32 %s15, 2
        // Predicated region
        $region45: #{tpu_custom_call.1} parent=43 // pred_check
          %p234 = pneg %p91
        $region46: #{tpu_custom_call.1} parent=43 // pred_check_branch
          %236 = sbr.rel (%p234) target = $region48
        $region47: #{tpu_custom_call.1} parent=43 // pred_region
          %s237 = sand.u32 %s76, 1
          %s238 = scalar_lea.sflag [#allocation4], %s237
          %s239 = sand.u32 %s76, 1
          %s240 = smul.addr %s239, 8
          %s241 = scalar_lea.vmem [#allocation7], %s240
          %243 = dma.done %s238, 128
        $region48: #{tpu_custom_call.1} parent=43 // pred_fallthru
          _
      $region44: #{tpu_custom_call.1} parent=5 // pred_fallthru
        _
    $region6: #{tpu_custom_call.1} parent=1 // loop_footer
      %s19 = sadd.s32 1, %s15
    $region7: #{tpu_custom_call.1} parent=1 // loop_footer_branch
      %14 = sbr.rel target = $region3
    $region8: #{tpu_custom_call.1} parent=1 // loop_exit
      _
    %244 = vsyncpa [#allocation3], 1
    %s245 = scalar_lea.sflag [#allocation3], 1
    %246 = vsyncpa %s245, 1
    %247 = vsyncpa [#allocation6], 1
    %s248 = scalar_lea.sflag [#allocation6], 1
    %249 = vsyncpa %s248, 1
    %250 = vsyncpa [#allocation4], 1
    %s251 = scalar_lea.sflag [#allocation4], 1
    %252 = vsyncpa %s251, 1

</llo_original>
